<compile_context>
chip_gen: v5e
topology: v5e:2x2
jax: 0.10.0
libtpu: 0.0.40
codegen_flags: <defaults>
</compile_context>

<pallas_src>
import jax
import jax.numpy as jnp
from jax import lax
from jax.experimental import pallas as pl
from jax.experimental.pallas import tpu as pltpu


def fused_conv1x1_sum_kernel(w_ref, b_ref, x_ref, o_ref):
    """out[p] = sum_c w[c] * x[c, p] + b   (pure VPU mul-adds).

    w_ref: SMEM (Cin,) folded weights (= W summed over output channels)
    b_ref: SMEM (1,)   folded bias    (= bias.sum())
    x_ref: VMEM (1, Cin, HW) one image, channel planes flattened over H*W
    o_ref: VMEM (1, 1, HW)   channel-summed conv interior for that image
    """
    cin = x_ref.shape[1]
    acc = x_ref[0, 0:1, :] * w_ref[0]                 # (1, HW)
    for c in range(1, cin):                           # Cin static (=3): unrolled
        acc = acc + x_ref[0, c:c + 1, :] * w_ref[c]
    o_ref[0] = acc + b_ref[0]


def model_forward(img, weight, bias):
    """img: (N, Cin, H, W) f32 (NCHW, like PyTorch).
    weight: (Cout, Cin, 1, 1), bias: (Cout,).
    Returns (N, H+2, W+2) f32 — matches conv(pad=1) -> permute -> sum(-1)."""
    n, cin, h, w = img.shape
    cout = weight.shape[0]
    hw = h * w

    # Fold the output-channel sum into the parameters (kills the matmul and
    # the axis=-1 reduce).  Scalars go to SMEM.
    w_fold = weight.reshape(cout, cin).sum(axis=0).astype(jnp.float32)   # (Cin,)
    b_fold = jnp.sum(bias.astype(jnp.float32)).reshape(1)                # (1,)

    # NCHW stays put: just flatten each channel plane.  Lane axis = H*W
    # (multiple of 128 here), no transpose / no zero-padded copy.
    x3 = img.astype(jnp.float32).reshape(n, cin, hw)

    interior = pl.pallas_call(
        fused_conv1x1_sum_kernel,
        out_shape=jax.ShapeDtypeStruct((n, 1, hw), jnp.float32),
        grid=(n,),
        in_specs=[
            pl.BlockSpec(memory_space=pltpu.MemorySpace.SMEM),   # w_fold
            pl.BlockSpec(memory_space=pltpu.MemorySpace.SMEM),   # b_fold
            pl.BlockSpec((1, cin, hw), lambda i: (i, 0, 0)),     # image i
        ],
        out_specs=pl.BlockSpec((1, 1, hw), lambda i: (i, 0, 0)),
        compiler_params=pltpu.CompilerParams(
            dimension_semantics=("parallel",)),
    )(w_fold, b_fold, x3)

    # Conv2d padding=1 with a 1x1 kernel: the border only sees zeros, so the
    # channel-summed value there is exactly sum(bias).  Constant post-fill.
    interior = interior.reshape(n, h, w)
    return lax.pad(interior, b_fold[0], ((0, 0, 0), (1, 1, 0), (1, 1, 0)))


if __name__ == "__main__":
    key = jax.random.PRNGKey(0)
    k_img, k_w, k_b = jax.random.split(key, 3)

    # Small shapes consistent with the module: batch=2, Cin=3, spatial=16.
    img = jax.random.normal(k_img, (2, 3, 16, 16), dtype=jnp.float32)

    # Deterministic Conv2d(3, 2, 1) parameters (uniform init like PyTorch).
    fan_in = 3 * 1 * 1
    bound = 1.0 / (fan_in ** 0.5)
    weight = jax.random.uniform(k_w, (2, 3, 1, 1), minval=-bound, maxval=bound,
                                dtype=jnp.float32)
    bias = jax.random.uniform(k_b, (2,), minval=-bound, maxval=bound,
                              dtype=jnp.float32)

    res = model_forward(img, weight, bias)
    jax.block_until_ready(res)

    # Pure-JAX reference of the same math (zero-pad -> 1x1 conv -> channel sum).
    img_pad = jnp.pad(img, ((0, 0), (0, 0), (1, 1), (1, 1)))
    w2d = weight.reshape(2, 3)
    conv = jnp.einsum("nchw,oc->nohw", img_pad, w2d) + bias[None, :, None, None]
    ref = conv.sum(axis=1)

    assert res.shape == (2, 18, 18)
    assert jnp.allclose(res, ref, atol=1e-5), "mismatch vs reference"

    print("KERNEL_OK")
</pallas_src>

<mosaic_0001>
module attributes {stable_mosaic.version = 11 : i64} {
  func.func @fused_conv1x1_sum_kernel(%arg0: i32, %arg1: memref<3xf32, #tpu.memory_space<smem>>, %arg2: memref<1xf32, #tpu.memory_space<smem>>, %arg3: memref<1x3x256xf32, #tpu.memory_space<vmem>>, %arg4: memref<1x1x256xf32, #tpu.memory_space<vmem>>) attributes {dimension_semantics = [#tpu.dimension_semantics<parallel>], iteration_bounds = array<i64: 2>, scalar_prefetch = 0 : i64, scratch_operands = 0 : i64, tpu.core_type = #tpu.core_type<tc>, window_params = [{transform_indices = @transform_0, window_bounds = array<i64: 3>}, {transform_indices = @transform_1, window_bounds = array<i64: 1>}, {transform_indices = @transform_2, window_bounds = array<i64: 1, 3, 256>}, {transform_indices = @transform_3, window_bounds = array<i64: 1, 1, 256>}]} {
    %c0 = arith.constant 0 : index
    %c0_0 = arith.constant 0 : index
    %c0_1 = arith.constant 0 : index
    %0 = vector.load %arg3[%c0, %c0_0, %c0_1] : memref<1x3x256xf32, #tpu.memory_space<vmem>>, vector<1x1x256xf32>
    %1 = vector.shape_cast %0 : vector<1x1x256xf32> to vector<1x256xf32>
    %c0_2 = arith.constant 0 : index
    %2 = memref.load %arg1[%c0_2] : memref<3xf32, #tpu.memory_space<smem>>
    %3 = vector.broadcast %2 : f32 to vector<1x256xf32>
    %4 = arith.mulf %1, %3 : vector<1x256xf32>
    %c0_3 = arith.constant 0 : index
    %c1 = arith.constant 1 : index
    %c0_4 = arith.constant 0 : index
    %5 = vector.load %arg3[%c0_3, %c1, %c0_4] : memref<1x3x256xf32, #tpu.memory_space<vmem>>, vector<1x1x256xf32>
    %6 = vector.shape_cast %5 : vector<1x1x256xf32> to vector<1x256xf32>
    %c1_5 = arith.constant 1 : index
    %7 = memref.load %arg1[%c1_5] : memref<3xf32, #tpu.memory_space<smem>>
    %8 = vector.broadcast %7 : f32 to vector<1x256xf32>
    %9 = arith.mulf %6, %8 : vector<1x256xf32>
    %10 = arith.addf %4, %9 : vector<1x256xf32>
    %c0_6 = arith.constant 0 : index
    %c2 = arith.constant 2 : index
    %c0_7 = arith.constant 0 : index
    %11 = vector.load %arg3[%c0_6, %c2, %c0_7] : memref<1x3x256xf32, #tpu.memory_space<vmem>>, vector<1x1x256xf32>
    %12 = vector.shape_cast %11 : vector<1x1x256xf32> to vector<1x256xf32>
    %c2_8 = arith.constant 2 : index
    %13 = memref.load %arg1[%c2_8] : memref<3xf32, #tpu.memory_space<smem>>
    %14 = vector.broadcast %13 : f32 to vector<1x256xf32>
    %15 = arith.mulf %12, %14 : vector<1x256xf32>
    %16 = arith.addf %10, %15 : vector<1x256xf32>
    %c0_9 = arith.constant 0 : index
    %17 = memref.load %arg2[%c0_9] : memref<1xf32, #tpu.memory_space<smem>>
    %18 = vector.broadcast %17 : f32 to vector<1x256xf32>
    %19 = arith.addf %16, %18 : vector<1x256xf32>
    %c0_10 = arith.constant 0 : index
    %c0_11 = arith.constant 0 : index
    %c0_12 = arith.constant 0 : index
    %20 = vector.load %arg4[%c0_10, %c0_11, %c0_12] : memref<1x1x256xf32, #tpu.memory_space<vmem>>, vector<1x1x256xf32>
    %21 = vector.shape_cast %20 : vector<1x1x256xf32> to vector<1x256xf32>
    %22 = vector.shape_cast %19 : vector<1x256xf32> to vector<1x1x256xf32>
    tpu.vector_store %arg4[%c0_10, %c0_11, %c0_12], %22 {strides = array<i32>} : memref<1x1x256xf32, #tpu.memory_space<vmem>>, vector<1x1x256xf32>,
    return
  }
  func.func @transform_0(%arg0: i32) -> i32 {
    %c0_i32 = arith.constant 0 : i32
    %c0_i32_0 = arith.constant 0 : i32
    return %c0_i32 : i32
  }
  func.func @transform_1(%arg0: i32) -> i32 {
    %c0_i32 = arith.constant 0 : i32
    %c0_i32_0 = arith.constant 0 : i32
    return %c0_i32 : i32
  }
  func.func @transform_2(%arg0: i32) -> (i32, i32, i32) {
    %c0_i32 = arith.constant 0 : i32
    %c0_i32_0 = arith.constant 0 : i32
    %c0_i32_1 = arith.constant 0 : i32
    return %arg0, %c0_i32, %c0_i32_0 : i32, i32, i32
  }
  func.func @transform_3(%arg0: i32) -> (i32, i32, i32) {
    %c0_i32 = arith.constant 0 : i32
    %c0_i32_0 = arith.constant 0 : i32
    %c0_i32_1 = arith.constant 0 : i32
    return %arg0, %c0_i32, %c0_i32_0 : i32, i32, i32
  }
}

</mosaic_0001>

<llo_original>
// kernel: tpu_custom_call.1
$region0: #{tpu_custom_call.1}
  #allocation0 [shape = 'u32[]', space=smem, size = 0x4, offset = 0x4, fixed_abs, tag = 'smem constant byte address 0x4 - core index']
  #allocation1 [shape = 'u32[72,128]{1,0:T(1,128)}', space=vmem, size = 0x9000, scoped, tag = 'internal scratch']
  #allocation2 [shape = 'f32[1]{0:T(128)S(6)}', space=smem, size = 0x200, scoped, tag = 'scoped memory for tpu_custom_call.1']
  %s0 = inlined_call_operand.vmem [shape: f32[3], index: 0, kind: input, shape index: {}]
  %s1 = inlined_call_operand.<no memory space> [shape: f32[1], index: 1, kind: input, shape index: {}]
  %s2 = inlined_call_operand.vmem [shape: f32[2,3,256], index: 2, kind: input, shape index: {}]
  %s3 = inlined_call_operand.hbm [shape: f32[2,1,256], index: 3, kind: output, shape index: {}]
  %s4 = sld [smem:[#allocation0]]
  $region49: #{tpu_custom_call.1} parent=0
    _
  %s6 = ssub.s32 1, %s4
  %s7 = scalar_select 0, %s6, %s4
  %8 = sst [smem:[#allocation2]] %s1
  $region1: #{tpu_custom_call.1} parent=0
    #allocation3 [shape = 'u8[512]{0}', space=smem, size = 0x200, scoped, tag = 'input window, operand 0, single buffered']
    #allocation4 [shape = 's32[2]{0}', space=sflag, size = 0x8, scoped, tag = 'scoped memory for tpu_custom_call.1']
    #allocation5 [shape = 's32[2]{0}', space=sflag, size = 0x8, scoped, tag = 'scoped memory for tpu_custom_call.1']
    #allocation6 [shape = 'u8[2048]{0}', space=vmem, size = 0x800, scoped, tag = 'output window, operand 0']
    %9 = vsyncpa [#allocation5], 0
    %10 = vsyncpa [#allocation4], 0
    %s11 = scalar_lea.sflag [#allocation4], 1
    %12 = vsyncpa %s11, 0
    loop: start=0, step=1, limit=4
    $region2: #{tpu_custom_call.1} parent=1 // loop_pre_header
      _
    $region3: #{tpu_custom_call.1} parent=1 // loop_header
      %s14 = sphi 0, %s18
      %p15 = scmp.ge.s32.totalorder %s14, 4
      %s22 = sphi 0, %s22
      %s24 = sphi 0, %s22
      %s25 = sphi 0, %s24
      %s39 = sphi 0, %s25
      %s43 = sphi 0, %s43
      %s45 = sphi 0, %s43
      %s46 = sphi 0, %s45
      %s60 = sphi 0, %s46
      %s66 = sphi 0, %s68
      %s69 = sphi 0, %s66
      %s70 = sphi 0, %s69
      %s86 = sphi 0, %s70
      %s92 = sphi 0, %s94
      %s95 = sphi 0, %s92
      %s96 = sphi 0, %s95
      %s112 = sphi 0, %s96
    $region4: #{tpu_custom_call.1} parent=1 // loop_header_branch
      %17 = sbr.rel (%p15) target = $region8
    $region5: #{tpu_custom_call.1} parent=1 // loop_body
      %s19 = ssub.s32 %s14, 1
      %s20 = ssub.s32 %s14, 2
      %s21 = sadd.s32 %s14, 1
      %s23 = sadd.s32 %s22, 1
      %p26 = scmp.eq.s32.totalorder %s14, 1
      %p27 = scmp.ne.s32.totalorder %s22, %s24
      %p28 = scmp.eq.s32.totalorder %s14, 0
      %p29 = por %p27, %p28
      %p30 = scmp.ne.s32.totalorder %s22, %s24
      %p31 = scmp.eq.s32.totalorder %s19, 1
      %p32 = por %p30, %p31
      %p33 = scmp.ne.s32.totalorder %s24, %s25
      %p34 = scmp.eq.s32.totalorder %s19, 0
      %p35 = por %p33, %p34
      %p36 = scmp.ne.s32.totalorder %s24, %s25
      %p37 = scmp.eq.s32.totalorder %s20, 1
      %p38 = por %p36, %p37
      %p40 = scmp.ne.s32.totalorder %s25, %s39
      %p41 = scmp.eq.s32.totalorder %s20, 0
      %p42 = por %p40, %p41
      %s44 = sadd.s32 %s43, 1
      %p47 = scmp.eq.s32.totalorder %s14, 1
      %p48 = scmp.ne.s32.totalorder %s43, %s45
      %p49 = scmp.eq.s32.totalorder %s14, 0
      %p50 = por %p48, %p49
      %p51 = scmp.ne.s32.totalorder %s43, %s45
      %p52 = scmp.eq.s32.totalorder %s19, 1
      %p53 = por %p51, %p52
      %p54 = scmp.ne.s32.totalorder %s45, %s46
      %p55 = scmp.eq.s32.totalorder %s19, 0
      %p56 = por %p54, %p55
      %p57 = scmp.ne.s32.totalorder %s45, %s46
      %p58 = scmp.eq.s32.totalorder %s20, 1
      %p59 = por %p57, %p58
      %p61 = scmp.ne.s32.totalorder %s46, %s60
      %p62 = scmp.eq.s32.totalorder %s20, 0
      %p63 = por %p61, %p62
      %s64 = ssub.s32 %s14, %s21
      %p65 = scmp.eq.s32.totalorder %s64, 0
      %s67 = sadd.s32 %s66, 1
      %s68 = scalar_select %p65, %s66, %s67
      %p71 = pneg %p65
      %p72 = scmp.eq.s32.totalorder %s14, 1
      %p73 = por %p71, %p72
      %p74 = scmp.ne.s32.totalorder %s66, %s69
      %p75 = scmp.eq.s32.totalorder %s14, 0
      %p76 = por %p74, %p75
      %p77 = scmp.ne.s32.totalorder %s66, %s69
      %p78 = scmp.eq.s32.totalorder %s19, 1
      %p79 = por %p77, %p78
      %p80 = scmp.ne.s32.totalorder %s69, %s70
      %p81 = scmp.eq.s32.totalorder %s19, 0
      %p82 = por %p80, %p81
      %p83 = scmp.ne.s32.totalorder %s69, %s70
      %p84 = scmp.eq.s32.totalorder %s20, 1
      %p85 = por %p83, %p84
      %p87 = scmp.ne.s32.totalorder %s70, %s86
      %p88 = scmp.eq.s32.totalorder %s20, 0
      %p89 = por %p87, %p88
      %s90 = ssub.s32 %s14, %s21
      %p91 = scmp.eq.s32.totalorder %s90, 0
      %s93 = sadd.s32 %s92, 1
      %s94 = scalar_select %p91, %s92, %s93
      %p97 = pneg %p91
      %p98 = scmp.eq.s32.totalorder %s14, 1
      %p99 = por %p97, %p98
      %p100 = scmp.ne.s32.totalorder %s92, %s95
      %p101 = scmp.eq.s32.totalorder %s14, 0
      %p102 = por %p100, %p101
      %p103 = scmp.ne.s32.totalorder %s92, %s95
      %p104 = scmp.eq.s32.totalorder %s19, 1
      %p105 = por %p103, %p104
      %p106 = scmp.ne.s32.totalorder %s95, %s96
      %p107 = scmp.eq.s32.totalorder %s19, 0
      %p108 = por %p106, %p107
      %p109 = scmp.ne.s32.totalorder %s95, %s96
      %p110 = scmp.eq.s32.totalorder %s20, 1
      %p111 = por %p109, %p110
      %p113 = scmp.ne.s32.totalorder %s96, %s112
      %p114 = scmp.eq.s32.totalorder %s20, 0
      %p115 = por %p113, %p114
      %p116 = scmp.le.s32.totalorder 1, %s14
      %p117 = scmp.lt.s32.totalorder %s14, 3
      %p118 = pnand %p116, %p117
      %p119 = pneg %p118
      // Predicated region
      $region9: #{tpu_custom_call.1} parent=5 // pred_check
        _
      $region10: #{tpu_custom_call.1} parent=5 // pred_check_branch
        %121 = sbr.rel (%p118) target = $region12
      $region11: #{tpu_custom_call.1} parent=5 // pred_region
        %s122 = ssub.s32 %s14, 1
        // Predicated region
        $region13: #{tpu_custom_call.1} parent=11 // pred_check
          %p123 = pneg %p35
        $region14: #{tpu_custom_call.1} parent=11 // pred_check_branch
          %125 = sbr.rel (%p123) target = $region16
        $region15: #{tpu_custom_call.1} parent=11 // pred_region
          %127 = vsyncadd [#allocation5], 0
          %s129 = sshll.u32 %s0, 4
          %s130 = int_to_ptr.vmem [resolvable:$true] %s129
          %132 = dma.vmem_to_smem %s130, 16, [#allocation3], [#allocation5]
        $region16: #{tpu_custom_call.1} parent=11 // pred_fallthru
          _
        // Predicated region
        $region17: #{tpu_custom_call.1} parent=11 // pred_check
          %p133 = pneg %p56
        $region18: #{tpu_custom_call.1} parent=11 // pred_check_branch
          %135 = sbr.rel (%p133) target = $region20
        $region19: #{tpu_custom_call.1} parent=11 // pred_region
          _
        $region20: #{tpu_custom_call.1} parent=11 // pred_fallthru
          _
      $region12: #{tpu_custom_call.1} parent=5 // pred_fallthru
        _
      %p136 = scmp.lt.s32.totalorder %s14, 2
      // Predicated region
      $region21: #{tpu_custom_call.1} parent=5 // pred_check
        %p137 = pneg %p136
      $region22: #{tpu_custom_call.1} parent=5 // pred_check_branch
        %139 = sbr.rel (%p137) target = $region24
      $region23: #{tpu_custom_call.1} parent=5 // pred_region
        // Predicated region
        $region25: #{tpu_custom_call.1} parent=23 // pred_check
          %p140 = pneg %p76
        $region26: #{tpu_custom_call.1} parent=23 // pred_check_branch
          %142 = sbr.rel (%p140) target = $region28
        $region27: #{tpu_custom_call.1} parent=23 // pred_region
          %p143 = scmp.lt.s32.totalorder %s14, 1
          %s144 = scalar_select %p143, %s14, 1
          %s145 = smul.addr %s144, 2
          %s146 = smul.addr %s145, 4
          %s147 = scalar_lea.vmem %s2, %s146
        $region28: #{tpu_custom_call.1} parent=23 // pred_fallthru
          _
      $region24: #{tpu_custom_call.1} parent=5 // pred_fallthru
        _
      %p148 = scmp.le.s32.totalorder 1, %s14
      %p149 = scmp.lt.s32.totalorder %s14, 3
      %p150 = pnand %p148, %p149
      %p151 = pneg %p150
      // Predicated region
      $region29: #{tpu_custom_call.1} parent=5 // pred_check
        _
      $region30: #{tpu_custom_call.1} parent=5 // pred_check_branch
        %153 = sbr.rel (%p150) target = $region32
      $region31: #{tpu_custom_call.1} parent=5 // pred_region
        %s154 = ssub.s32 %s14, 1
        // Predicated region
        $region33: #{tpu_custom_call.1} parent=31 // pred_check
          %p155 = pneg %p35
        $region34: #{tpu_custom_call.1} parent=31 // pred_check_branch
          %157 = sbr.rel (%p155) target = $region36
        $region35: #{tpu_custom_call.1} parent=31 // pred_region
          %159 = dma.done [#allocation5], 16
        $region36: #{tpu_custom_call.1} parent=31 // pred_fallthru
          _
        %160 = sfence
        %p161 = pneg %p35
        %p162 = pneg %p32
        %p163 = pneg %p56
        %p164 = pneg %p53
        %p165 = scmp.lt.s32.totalorder %s19, 1
        %s166 = scalar_select %p165, %s19, 1
        %s167 = smul.addr %s166, 2
        %s168 = smul.addr %s167, 4
        %s169 = scalar_lea.vmem %s2, %s168
        %p170 = pneg %p82
        %p171 = pneg %p79
        %p172 = pneg %p108
        %p173 = pneg %p105
        %s174 = sand.u32 %s95, 1
        %s175 = scalar_lea.sflag [#allocation4], %s174
        %s176 = sand.u32 %s95, 1
        %s177 = smul.addr %s176, 2
        %s178 = scalar_lea.vmem [#allocation6], %s177
        %p179 = scmp.lt.s32.totalorder %s19, 1
        %s180 = scalar_select %p179, %s19, 1
        %s181 = smul.addr %s180, 2
        %s182 = smul.addr %s181, 4
        %s183 = scalar_lea.vmem %s2, %s182
        %v184 = vld [vmem:[%s183] ss:$4 sm:$0x3]
        %s185 = sld [smem:[#allocation3]]
        %v186 = vstv %s185
        %v187 = vmul.f32 %v184, %v186
        %s188 = scalar_lea.vmem %s183, 1
        %v189 = vld [vmem:[%s188] ss:$4 sm:$0x3]
        %s190 = sld [smem:[#allocation3 + $0x1]]
        %v191 = vstv %s190
        %v192 = vmul.f32 %v189, %v191
        %v193 = vadd.f32 %v187, %v192
        %s194 = scalar_lea.vmem %s183, 2
        %v195 = vld [vmem:[%s194] ss:$4 sm:$0x3]
        %s196 = sld [smem:[#allocation3 + $0x2]]
        %v197 = vstv %s196
        %v198 = vmul.f32 %v195, %v197
        %v199 = vadd.f32 %v193, %v198
        %s200 = sld [smem:[#allocation2]]
        %v201 = vstv %s200
        %v202 = vadd.f32 %v199, %v201
        %v203 = vlaneseq
        %vm204 = vcmp.ge.s32.totalorder %v203, 0
        %vm205 = vcmp.lt.s32.totalorder %v203, 256
        %vm206 = vmand %vm204, %vm205
        %207 = vst.msk [vmem:[%s178] sm:$0x3] %vm206, %v202
        %s208 = sand.u32 %s95, 1
        %s209 = scalar_lea.sflag [#allocation4], %s208
        %s210 = sand.u32 %s95, 1
        %s211 = smul.addr %s210, 2
        %s212 = scalar_lea.vmem [#allocation6], %s211
        // Predicated region
        $region37: #{tpu_custom_call.1} parent=31 // pred_check
          %p213 = pneg %p105
        $region38: #{tpu_custom_call.1} parent=31 // pred_check_branch
          %215 = sbr.rel (%p213) target = $region40
        $region39: #{tpu_custom_call.1} parent=31 // pred_region
          %217 = vsyncadd %s209, 0
          %s218 = smul.addr %s19, 2
          %s219 = scalar_lea.hbm %s3, %s218
          %s221 = sshll.u32 %s212, 4
          %s222 = int_to_ptr.vmem [resolvable:$true] %s221
          %s223 = sshll.u32 %s219, 4
          %s224 = int_to_ptr.hbm [resolvable:$true] %s223
          %226 = dma.vmem_to_hbm [thread:$0]  %s222, 32, %s224, %s209
        $region40: #{tpu_custom_call.1} parent=31 // pred_fallthru
          _
      $region32: #{tpu_custom_call.1} parent=5 // pred_fallthru
        _
      %p227 = scmp.le.s32.totalorder 2, %s14
      // Predicated region
      $region41: #{tpu_custom_call.1} parent=5 // pred_check
        %p228 = pneg %p227
      $region42: #{tpu_custom_call.1} parent=5 // pred_check_branch
        %230 = sbr.rel (%p228) target = $region44
      $region43: #{tpu_custom_call.1} parent=5 // pred_region
        %s231 = ssub.s32 %s14, 2
        // Predicated region
        $region45: #{tpu_custom_call.1} parent=43 // pred_check
          %p232 = pneg %p111
        $region46: #{tpu_custom_call.1} parent=43 // pred_check_branch
          %234 = sbr.rel (%p232) target = $region48
        $region47: #{tpu_custom_call.1} parent=43 // pred_region
          %s235 = sand.u32 %s96, 1
          %s236 = scalar_lea.sflag [#allocation4], %s235
          %s237 = sand.u32 %s96, 1
          %s238 = smul.addr %s237, 2
          %s239 = scalar_lea.vmem [#allocation6], %s238
          %241 = dma.done %s236, 32
        $region48: #{tpu_custom_call.1} parent=43 // pred_fallthru
          _
      $region44: #{tpu_custom_call.1} parent=5 // pred_fallthru
        _
    $region6: #{tpu_custom_call.1} parent=1 // loop_footer
      %s18 = sadd.s32 1, %s14
    $region7: #{tpu_custom_call.1} parent=1 // loop_footer_branch
      %13 = sbr.rel target = $region3
    $region8: #{tpu_custom_call.1} parent=1 // loop_exit
      _
    %242 = vsyncpa [#allocation4], 1
    %s243 = scalar_lea.sflag [#allocation4], 1
    %244 = vsyncpa %s243, 1
    %245 = vsyncpa [#allocation5], 1
    %s246 = scalar_lea.sflag [#allocation5], 1
    %247 = vsyncpa %s246, 1

</llo_original>
